<compile_context>
chip_gen: v7x
topology: tpu7x:2x2x1
jax: 0.10.0
libtpu: 0.0.40
codegen_flags: <defaults>
</compile_context>

<pallas_src>
import functools

import jax
import jax.numpy as jnp
from jax import lax
from jax.experimental import pallas as pl
from jax.experimental.pallas import tpu as pltpu


def _self_attention_kernel(x_ref, w_ref, attn_ref, out_ref, qkv_ref, ctx_ref,
                           *, heads, dim_head, compute_dtype):
    # Grid: (B, heads).  Per step:
    #   x_ref:    (1, N, D)        current batch element (compute_dtype)
    #   w_ref:    (D, 3*H*Dh)      fused QKV weight, Q columns pre-scaled
    #   attn_ref: (1, 1, N, N)     this head's attention matrix
    #   out_ref:  (1, N, H*Dh)     resident across the head axis
    #   qkv_ref:  (3*H, N, Dh)     VMEM scratch (compute_dtype), persists
    #   ctx_ref:  (H, N, Dh) f32   VMEM scratch, per-head context
    h = pl.program_id(1)

    # ---- once per batch element: fused QKV projection into scratch ---------
    @pl.when(h == 0)
    def _():
        qkv = jnp.dot(x_ref[0], w_ref[...],
                      preferred_element_type=jnp.float32)      # (N, 3*H*Dh) f32
        # Static split into (q|k|v, head) slabs so the per-head hot path does
        # leading-axis indexing instead of lane-unaligned column slicing.
        for g in range(3 * heads):
            qkv_ref[g] = qkv[:, g * dim_head:(g + 1) * dim_head].astype(
                compute_dtype)

    # ---- per-head attention -------------------------------------------------
    q = qkv_ref[h]                  # (N, Dh); softmax scale already folded in
    k = qkv_ref[heads + h]
    v = qkv_ref[2 * heads + h]

    # Contract last dims of both operands -> no explicit k.T, f32 accumulation.
    dots = lax.dot_general(q, k, (((1,), (1,)), ((), ())),
                           preferred_element_type=jnp.float32)  # (N, N) f32

    # Numerically stable softmax in f32.  attn is user-visible, so use the
    # exact reciprocal (not pl.reciprocal(approx=True)).
    m = jnp.max(dots, axis=-1, keepdims=True)
    e = jnp.exp(dots - m)
    denom = jnp.sum(e, axis=-1, keepdims=True)
    attn = e / denom
    attn_ref[0, 0] = attn.astype(attn_ref.dtype)

    ctx_ref[h] = jnp.dot(attn.astype(compute_dtype), v,
                         preferred_element_type=jnp.float32)    # (N, Dh) f32

    # ---- last head: one lane-dense (N, H*Dh) context store ------------------
    @pl.when(h == heads - 1)
    def _():
        out_ref[0] = jnp.concatenate(
            [ctx_ref[i] for i in range(heads)], axis=-1).astype(out_ref.dtype)


def prepare_qkv_weight(w_qkv, *, heads, dim_head, dtype=jnp.bfloat16):
    """One-time weight prep (hoist out of the per-call hot path).

    w_qkv: torch nn.Linear weight layout, shape (3*heads*dim_head, dim).
    Returns a (dim, 3*heads*dim_head) slab whose columns are ordered
    [q(h d) | k(h d) | v(h d)] with the softmax scale folded into the Q
    columns (in f32, before the cast), cast to the MXU compute dtype.
    """
    inner = heads * dim_head
    scale = float(dim_head) ** (-0.5)
    wt = jnp.transpose(w_qkv).astype(jnp.float32)              # (D, 3*inner)
    col_scale = jnp.concatenate([
        jnp.full((inner,), scale, dtype=jnp.float32),
        jnp.ones((2 * inner,), dtype=jnp.float32),
    ])
    return (wt * col_scale[None, :]).astype(dtype)


def _round_up(n, m):
    return ((n + m - 1) // m) * m


def _padded_vmem_bytes(shape, dtype):
    """Conservative VMEM footprint of one buffer: pad last dims to (8, 128)."""
    s = list(shape)
    s[-1] = _round_up(s[-1], 128)
    if len(s) >= 2:
        s[-2] = _round_up(s[-2], 8)
    n = 1
    for d in s:
        n *= d
    return n * jnp.dtype(dtype).itemsize


def self_attention_pallas(x, w_fused, *, heads, dim_head,
                          compute_dtype=jnp.bfloat16,
                          attn_dtype=None, out_dtype=None):
    """x: (B, N, D).  w_fused: (D, 3*heads*dim_head) from prepare_qkv_weight.

    Returns (attn, out) with attn: (B, H, N, N), out: (B, N, H*dim_head),
    matching the PyTorch module's forward semantics.
    """
    B, N, D = x.shape
    inner = heads * dim_head
    assert w_fused.shape == (D, 3 * inner)
    attn_dtype = x.dtype if attn_dtype is None else attn_dtype
    out_dtype = x.dtype if out_dtype is None else out_dtype

    x_c = x.astype(compute_dtype)
    w_c = w_fused.astype(compute_dtype)

    kernel = functools.partial(_self_attention_kernel, heads=heads,
                               dim_head=dim_head, compute_dtype=compute_dtype)

    # ---- explicit VMEM budget (input/output blocks double-buffered; the
    # constant-index weight block is still double-buffered by default, so it
    # is counted twice here).  2x headroom for compiler-internal scratch.
    vmem_used = (
        2 * _padded_vmem_bytes((1, N, D), compute_dtype)             # x block
        + 2 * _padded_vmem_bytes((D, 3 * inner), compute_dtype)      # weight
        + 2 * _padded_vmem_bytes((1, 1, N, N), attn_dtype)           # attn blk
        + 2 * _padded_vmem_bytes((1, N, inner), out_dtype)           # out blk
        + _padded_vmem_bytes((3 * heads, N, dim_head), compute_dtype)
        + _padded_vmem_bytes((heads, N, dim_head), jnp.float32))
    vmem_limit = int(min(128 * 1024 * 1024,
                         max(8 * 1024 * 1024, 2 * vmem_used)))

    in_bytes = jnp.dtype(compute_dtype).itemsize
    cost = pl.CostEstimate(
        flops=int(2 * B * N * D * 3 * inner               # fused QKV projection
                  + 2 * B * heads * N * N * dim_head      # q @ k^T
                  + 2 * B * heads * N * N * dim_head),    # attn @ v
        transcendentals=int(B * heads * N * N),
        bytes_accessed=int(
            x_c.size * in_bytes + w_c.size * in_bytes
            + B * heads * N * N * jnp.dtype(attn_dtype).itemsize
            + B * N * inner * jnp.dtype(out_dtype).itemsize),
    )

    attn, out = pl.pallas_call(
        kernel,
        out_shape=(
            jax.ShapeDtypeStruct((B, heads, N, N), attn_dtype),
            jax.ShapeDtypeStruct((B, N, inner), out_dtype),
        ),
        grid_spec=pltpu.PrefetchScalarGridSpec(
            num_scalar_prefetch=0,
            grid=(B, heads),
            in_specs=[
                # Index maps constant in h: x fetched once per batch element,
                # the weight slab fetched once per call (no re-DMA per head).
                pl.BlockSpec((1, N, D), lambda b, h: (b, 0, 0)),
                pl.BlockSpec((D, 3 * inner), lambda b, h: (0, 0)),
            ],
            out_specs=[
                pl.BlockSpec((1, 1, N, N), lambda b, h: (b, h, 0, 0)),
                # Constant in h: block stays VMEM-resident across the head
                # axis and is written back once per batch element.
                pl.BlockSpec((1, N, inner), lambda b, h: (b, 0, 0)),
            ],
            scratch_shapes=[
                pltpu.VMEM((3 * heads, N, dim_head), compute_dtype),
                pltpu.VMEM((heads, N, dim_head), jnp.float32),
            ],
        ),
        compiler_params=pltpu.CompilerParams(
            dimension_semantics=("parallel", "arbitrary"),
            vmem_limit_bytes=vmem_limit),
        cost_estimate=cost,
    )(x_c, w_c)
    return attn, out


def _reference(x, w_qkv, *, heads, dim_head):
    B, N, D = x.shape
    inner = heads * dim_head
    scale = float(dim_head) ** (-0.5)
    qkv = x @ w_qkv.T                                            # (B, N, 3*inner)
    q, k, v = jnp.split(qkv, 3, axis=-1)

    def to_bhnd(t):
        return jnp.transpose(t.reshape(B, N, heads, dim_head), (0, 2, 1, 3))

    q, k, v = map(to_bhnd, (q, k, v))
    dots = jnp.einsum("bhnd,bhmd->bhnm", q, k) * scale
    attn = jax.nn.softmax(dots, axis=-1)
    out = jnp.einsum("bhnm,bhmd->bhnd", attn, v)
    out = jnp.transpose(out, (0, 2, 1, 3)).reshape(B, N, inner)
    return attn, out


if __name__ == "__main__":
    # Small shapes consistent with the module: dim=16, heads=2, dim_head=32.
    B, N, D = 2, 8, 16
    HEADS, DIM_HEAD = 2, 32

    key = jax.random.PRNGKey(0)
    kx, kw = jax.random.split(key)
    x = jax.random.normal(kx, (B, N, D), dtype=jnp.float32)
    # Deterministic init of the to_qkv Linear weight: shape (3*inner_dim, dim).
    w_qkv = (jax.random.normal(kw, (3 * HEADS * DIM_HEAD, D), dtype=jnp.float32)
             * (1.0 / jnp.sqrt(D)))

    attn_gold, out_gold = _reference(x, w_qkv, heads=HEADS, dim_head=DIM_HEAD)

    # --- f32 MXU path: strict semantics check (exact softmax reciprocal).
    w32 = prepare_qkv_weight(w_qkv, heads=HEADS, dim_head=DIM_HEAD,
                             dtype=jnp.float32)
    attn, out = self_attention_pallas(x, w32, heads=HEADS, dim_head=DIM_HEAD,
                                      compute_dtype=jnp.float32)
    jax.block_until_ready((attn, out))
    assert attn.shape == (B, HEADS, N, N)
    assert out.shape == (B, N, HEADS * DIM_HEAD)
    assert jnp.allclose(attn, attn_gold, atol=1e-4, rtol=1e-4)
    assert jnp.allclose(out, out_gold, atol=1e-4, rtol=1e-4)

    # --- default bf16 MXU path + bf16 attn output (halved dominant HBM store
    #     traffic, ~2x MXU throughput); looser tolerance.
    wbf = prepare_qkv_weight(w_qkv, heads=HEADS, dim_head=DIM_HEAD,
                             dtype=jnp.bfloat16)
    attn_b, out_b = self_attention_pallas(x, wbf, heads=HEADS,
                                          dim_head=DIM_HEAD,
                                          attn_dtype=jnp.bfloat16)
    jax.block_until_ready((attn_b, out_b))
    assert attn_b.dtype == jnp.bfloat16
    assert out_b.shape == (B, N, HEADS * DIM_HEAD)
    assert jnp.allclose(attn_b.astype(jnp.float32), attn_gold,
                        atol=1e-1, rtol=1e-1)
    assert jnp.allclose(out_b, out_gold, atol=1e-1, rtol=1e-1)

    print("KERNEL_OK")
</pallas_src>

<mosaic_0001>
module attributes {stable_mosaic.version = 11 : i64} {
  func.func @_self_attention_kernel(%arg0: i32, %arg1: i32, %arg2: memref<1x8x16xf32, #tpu.memory_space<vmem>>, %arg3: memref<16x192xf32, #tpu.memory_space<vmem>>, %arg4: memref<1x1x8x8xf32, #tpu.memory_space<vmem>>, %arg5: memref<1x8x64xf32, #tpu.memory_space<vmem>>, %arg6: memref<6x8x32xf32, #tpu.memory_space<vmem>>, %arg7: memref<2x8x32xf32, #tpu.memory_space<vmem>>) attributes {dimension_semantics = [#tpu.dimension_semantics<parallel>, #tpu.dimension_semantics<arbitrary>], iteration_bounds = array<i64: 2, 2>, scalar_prefetch = 0 : i64, scratch_operands = 2 : i64, tpu.core_type = #tpu.core_type<tc>, window_params = [{transform_indices = @transform_0, window_bounds = array<i64: 1, 8, 16>}, {pipeline_mode = #tpu.pipeline_mode<synchronous>, transform_indices = @transform_1, window_bounds = array<i64: 16, 192>}, {transform_indices = @transform_2, window_bounds = array<i64: 1, 1, 8, 8>}, {transform_indices = @transform_3, window_bounds = array<i64: 1, 8, 64>}]} {
    %c0_i32 = arith.constant 0 : i32
    %0 = arith.cmpi eq, %arg1, %c0_i32 : i32
    %1 = arith.extui %0 : i1 to i32
    %c0_i32_0 = arith.constant 0 : i32
    %2 = arith.cmpi ne, %1, %c0_i32_0 : i32
    scf.if %2 {
      %c0_16 = arith.constant 0 : index
      %c0_17 = arith.constant 0 : index
      %c0_18 = arith.constant 0 : index
      %35 = vector.load %arg2[%c0_16, %c0_17, %c0_18] : memref<1x8x16xf32, #tpu.memory_space<vmem>>, vector<1x8x16xf32>
      %36 = vector.shape_cast %35 : vector<1x8x16xf32> to vector<8x16xf32>
      %c0_19 = arith.constant 0 : index
      %c0_20 = arith.constant 0 : index
      %37 = vector.load %arg3[%c0_19, %c0_20] : memref<16x192xf32, #tpu.memory_space<vmem>>, vector<16x192xf32>
      %cst_21 = arith.constant dense<0.000000e+00> : vector<8x192xf32>
      %38 = tpu.matmul %36, %37, %cst_21 {dimension_numbers = #tpu.dot_dimension_numbers<[1], [0], [0], [1], [0, 0, 1, 1], [], []>} : vector<8x16xf32>, vector<16x192xf32>, vector<8x192xf32> -> vector<8x192xf32>
      %39 = vector.extract_strided_slice %38 {offsets = [0, 0], sizes = [8, 32], strides = [1, 1]} : vector<8x192xf32> to vector<8x32xf32>
      %c0_22 = arith.constant 0 : index
      %c0_23 = arith.constant 0 : index
      %c0_24 = arith.constant 0 : index
      %40 = vector.load %arg6[%c0_22, %c0_23, %c0_24] : memref<6x8x32xf32, #tpu.memory_space<vmem>>, vector<1x8x32xf32>
      %41 = vector.shape_cast %40 : vector<1x8x32xf32> to vector<8x32xf32>
      %42 = vector.shape_cast %39 : vector<8x32xf32> to vector<1x8x32xf32>
      tpu.vector_store %arg6[%c0_22, %c0_23, %c0_24], %42 {strides = array<i32>} : memref<6x8x32xf32, #tpu.memory_space<vmem>>, vector<1x8x32xf32>,
      %43 = vector.extract_strided_slice %38 {offsets = [0, 32], sizes = [8, 32], strides = [1, 1]} : vector<8x192xf32> to vector<8x32xf32>
      %c1 = arith.constant 1 : index
      %c0_25 = arith.constant 0 : index
      %c0_26 = arith.constant 0 : index
      %44 = vector.load %arg6[%c1, %c0_25, %c0_26] : memref<6x8x32xf32, #tpu.memory_space<vmem>>, vector<1x8x32xf32>
      %45 = vector.shape_cast %44 : vector<1x8x32xf32> to vector<8x32xf32>
      %46 = vector.shape_cast %43 : vector<8x32xf32> to vector<1x8x32xf32>
      tpu.vector_store %arg6[%c1, %c0_25, %c0_26], %46 {strides = array<i32>} : memref<6x8x32xf32, #tpu.memory_space<vmem>>, vector<1x8x32xf32>,
      %47 = vector.extract_strided_slice %38 {offsets = [0, 64], sizes = [8, 32], strides = [1, 1]} : vector<8x192xf32> to vector<8x32xf32>
      %c2 = arith.constant 2 : index
      %c0_27 = arith.constant 0 : index
      %c0_28 = arith.constant 0 : index
      %48 = vector.load %arg6[%c2, %c0_27, %c0_28] : memref<6x8x32xf32, #tpu.memory_space<vmem>>, vector<1x8x32xf32>
      %49 = vector.shape_cast %48 : vector<1x8x32xf32> to vector<8x32xf32>
      %50 = vector.shape_cast %47 : vector<8x32xf32> to vector<1x8x32xf32>
      tpu.vector_store %arg6[%c2, %c0_27, %c0_28], %50 {strides = array<i32>} : memref<6x8x32xf32, #tpu.memory_space<vmem>>, vector<1x8x32xf32>,
      %51 = vector.extract_strided_slice %38 {offsets = [0, 96], sizes = [8, 32], strides = [1, 1]} : vector<8x192xf32> to vector<8x32xf32>
      %c3 = arith.constant 3 : index
      %c0_29 = arith.constant 0 : index
      %c0_30 = arith.constant 0 : index
      %52 = vector.load %arg6[%c3, %c0_29, %c0_30] : memref<6x8x32xf32, #tpu.memory_space<vmem>>, vector<1x8x32xf32>
      %53 = vector.shape_cast %52 : vector<1x8x32xf32> to vector<8x32xf32>
      %54 = vector.shape_cast %51 : vector<8x32xf32> to vector<1x8x32xf32>
      tpu.vector_store %arg6[%c3, %c0_29, %c0_30], %54 {strides = array<i32>} : memref<6x8x32xf32, #tpu.memory_space<vmem>>, vector<1x8x32xf32>,
      %55 = vector.extract_strided_slice %38 {offsets = [0, 128], sizes = [8, 32], strides = [1, 1]} : vector<8x192xf32> to vector<8x32xf32>
      %c4 = arith.constant 4 : index
      %c0_31 = arith.constant 0 : index
      %c0_32 = arith.constant 0 : index
      %56 = vector.load %arg6[%c4, %c0_31, %c0_32] : memref<6x8x32xf32, #tpu.memory_space<vmem>>, vector<1x8x32xf32>
      %57 = vector.shape_cast %56 : vector<1x8x32xf32> to vector<8x32xf32>
      %58 = vector.shape_cast %55 : vector<8x32xf32> to vector<1x8x32xf32>
      tpu.vector_store %arg6[%c4, %c0_31, %c0_32], %58 {strides = array<i32>} : memref<6x8x32xf32, #tpu.memory_space<vmem>>, vector<1x8x32xf32>,
      %59 = vector.extract_strided_slice %38 {offsets = [0, 160], sizes = [8, 32], strides = [1, 1]} : vector<8x192xf32> to vector<8x32xf32>
      %c5 = arith.constant 5 : index
      %c0_33 = arith.constant 0 : index
      %c0_34 = arith.constant 0 : index
      %60 = vector.load %arg6[%c5, %c0_33, %c0_34] : memref<6x8x32xf32, #tpu.memory_space<vmem>>, vector<1x8x32xf32>
      %61 = vector.shape_cast %60 : vector<1x8x32xf32> to vector<8x32xf32>
      %62 = vector.shape_cast %59 : vector<8x32xf32> to vector<1x8x32xf32>
      tpu.vector_store %arg6[%c5, %c0_33, %c0_34], %62 {strides = array<i32>} : memref<6x8x32xf32, #tpu.memory_space<vmem>>, vector<1x8x32xf32>,
    } else {
    }
    %3 = arith.index_cast %arg1 : i32 to index
    %c0 = arith.constant 0 : index
    %c0_1 = arith.constant 0 : index
    %4 = vector.load %arg6[%3, %c0, %c0_1] : memref<6x8x32xf32, #tpu.memory_space<vmem>>, vector<1x8x32xf32>
    %5 = vector.shape_cast %4 : vector<1x8x32xf32> to vector<8x32xf32>
    %c2_i32 = arith.constant 2 : i32
    %6 = arith.addi %c2_i32, %arg1 : i32
    %7 = arith.index_cast %6 : i32 to index
    %c0_2 = arith.constant 0 : index
    %c0_3 = arith.constant 0 : index
    %8 = vector.load %arg6[%7, %c0_2, %c0_3] : memref<6x8x32xf32, #tpu.memory_space<vmem>>, vector<1x8x32xf32>
    %9 = vector.shape_cast %8 : vector<1x8x32xf32> to vector<8x32xf32>
    %c4_i32 = arith.constant 4 : i32
    %10 = arith.addi %c4_i32, %arg1 : i32
    %11 = arith.index_cast %10 : i32 to index
    %c0_4 = arith.constant 0 : index
    %c0_5 = arith.constant 0 : index
    %12 = vector.load %arg6[%11, %c0_4, %c0_5] : memref<6x8x32xf32, #tpu.memory_space<vmem>>, vector<1x8x32xf32>
    %13 = vector.shape_cast %12 : vector<1x8x32xf32> to vector<8x32xf32>
    %cst = arith.constant dense<0.000000e+00> : vector<8x8xf32>
    %14 = tpu.matmul %5, %9, %cst {dimension_numbers = #tpu.dot_dimension_numbers<[1], [1], [0], [0], [0, 0, 1, 0], [], []>} : vector<8x32xf32>, vector<8x32xf32>, vector<8x8xf32> -> vector<8x8xf32>
    %cst_6 = arith.constant dense<0xFF800000> : vector<8xf32>
    %15 = vector.multi_reduction <maximumf>, %14, %cst_6 [1] : vector<8x8xf32> to vector<8xf32>
    %16 = vector.shape_cast %15 : vector<8xf32> to vector<8x1xf32>
    %17 = vector.broadcast %16 : vector<8x1xf32> to vector<8x8xf32>
    %18 = arith.subf %14, %17 : vector<8x8xf32>
    %19 = math.exp %18 : vector<8x8xf32>
    %cst_7 = arith.constant dense<0.000000e+00> : vector<8xf32>
    %20 = vector.multi_reduction <add>, %19, %cst_7 [1] : vector<8x8xf32> to vector<8xf32>
    %21 = vector.shape_cast %20 : vector<8xf32> to vector<8x1xf32>
    %22 = vector.broadcast %21 : vector<8x1xf32> to vector<8x8xf32>
    %23 = arith.divf %19, %22 : vector<8x8xf32>
    %c0_8 = arith.constant 0 : index
    %c0_9 = arith.constant 0 : index
    %c0_10 = arith.constant 0 : index
    %c0_11 = arith.constant 0 : index
    %24 = vector.load %arg4[%c0_8, %c0_9, %c0_10, %c0_11] : memref<1x1x8x8xf32, #tpu.memory_space<vmem>>, vector<1x1x8x8xf32>
    %25 = vector.shape_cast %24 : vector<1x1x8x8xf32> to vector<8x8xf32>
    %26 = vector.shape_cast %23 : vector<8x8xf32> to vector<1x1x8x8xf32>
    tpu.vector_store %arg4[%c0_8, %c0_9, %c0_10, %c0_11], %26 {strides = array<i32>} : memref<1x1x8x8xf32, #tpu.memory_space<vmem>>, vector<1x1x8x8xf32>,
    %cst_12 = arith.constant dense<0.000000e+00> : vector<8x32xf32>
    %27 = tpu.matmul %23, %13, %cst_12 {dimension_numbers = #tpu.dot_dimension_numbers<[1], [0], [0], [1], [0, 0, 1, 1], [], []>} : vector<8x8xf32>, vector<8x32xf32>, vector<8x32xf32> -> vector<8x32xf32>
    %28 = arith.index_cast %arg1 : i32 to index
    %c0_13 = arith.constant 0 : index
    %c0_14 = arith.constant 0 : index
    %29 = vector.load %arg7[%28, %c0_13, %c0_14] : memref<2x8x32xf32, #tpu.memory_space<vmem>>, vector<1x8x32xf32>
    %30 = vector.shape_cast %29 : vector<1x8x32xf32> to vector<8x32xf32>
    %31 = vector.shape_cast %27 : vector<8x32xf32> to vector<1x8x32xf32>
    tpu.vector_store %arg7[%28, %c0_13, %c0_14], %31 {strides = array<i32>} : memref<2x8x32xf32, #tpu.memory_space<vmem>>, vector<1x8x32xf32>,
    %c1_i32 = arith.constant 1 : i32
    %32 = arith.cmpi eq, %arg1, %c1_i32 : i32
    %33 = arith.extui %32 : i1 to i32
    %c0_i32_15 = arith.constant 0 : i32
    %34 = arith.cmpi ne, %33, %c0_i32_15 : i32
    scf.if %34 {
      %c0_16 = arith.constant 0 : index
      %c0_17 = arith.constant 0 : index
      %c0_18 = arith.constant 0 : index
      %35 = vector.load %arg7[%c0_16, %c0_17, %c0_18] : memref<2x8x32xf32, #tpu.memory_space<vmem>>, vector<1x8x32xf32>
      %36 = vector.shape_cast %35 : vector<1x8x32xf32> to vector<8x32xf32>
      %c1 = arith.constant 1 : index
      %c0_19 = arith.constant 0 : index
      %c0_20 = arith.constant 0 : index
      %37 = vector.load %arg7[%c1, %c0_19, %c0_20] : memref<2x8x32xf32, #tpu.memory_space<vmem>>, vector<1x8x32xf32>
      %38 = vector.shape_cast %37 : vector<1x8x32xf32> to vector<8x32xf32>
      %39 = tpu.concatenate %36, %38 in 1 : vector<8x32xf32>, vector<8x32xf32> -> vector<8x64xf32>
      %c0_21 = arith.constant 0 : index
      %c0_22 = arith.constant 0 : index
      %c0_23 = arith.constant 0 : index
      %40 = vector.load %arg5[%c0_21, %c0_22, %c0_23] : memref<1x8x64xf32, #tpu.memory_space<vmem>>, vector<1x8x64xf32>
      %41 = vector.shape_cast %40 : vector<1x8x64xf32> to vector<8x64xf32>
      %42 = vector.shape_cast %39 : vector<8x64xf32> to vector<1x8x64xf32>
      tpu.vector_store %arg5[%c0_21, %c0_22, %c0_23], %42 {strides = array<i32>} : memref<1x8x64xf32, #tpu.memory_space<vmem>>, vector<1x8x64xf32>,
    } else {
    }
    return
  }
  func.func @transform_0(%arg0: i32, %arg1: i32) -> (i32, i32, i32) {
    %c0_i32 = arith.constant 0 : i32
    %c0_i32_0 = arith.constant 0 : i32
    %c0_i32_1 = arith.constant 0 : i32
    return %arg0, %c0_i32, %c0_i32_0 : i32, i32, i32
  }
  func.func @transform_1(%arg0: i32, %arg1: i32) -> (i32, i32) {
    %c0_i32 = arith.constant 0 : i32
    %c0_i32_0 = arith.constant 0 : i32
    %c0_i32_1 = arith.constant 0 : i32
    return %c0_i32, %c0_i32_0 : i32, i32
  }
  func.func @transform_2(%arg0: i32, %arg1: i32) -> (i32, i32, i32, i32) {
    %c0_i32 = arith.constant 0 : i32
    %c0_i32_0 = arith.constant 0 : i32
    %c0_i32_1 = arith.constant 0 : i32
    return %arg0, %arg1, %c0_i32, %c0_i32_0 : i32, i32, i32, i32
  }
  func.func @transform_3(%arg0: i32, %arg1: i32) -> (i32, i32, i32) {
    %c0_i32 = arith.constant 0 : i32
    %c0_i32_0 = arith.constant 0 : i32
    %c0_i32_1 = arith.constant 0 : i32
    return %arg0, %c0_i32, %c0_i32_0 : i32, i32, i32
  }
}

</mosaic_0001>

<llo_original>
// kernel: tpu_custom_call.1
$region0: #{tpu_custom_call.1}
  #allocation0 [shape = 'u32[]', space=smem, size = 0x4, offset = 0x4, fixed_abs, tag = 'smem constant byte address 0x4 - core index']
  #allocation1 [shape = 'u32[144,128]{1,0:T(1,128)}', space=vmem, size = 0x12000, scoped, tag = 'internal scratch']
  #allocation2 [shape = 'f32[6,8,32]{2,1,0:T(8,128)}', space=vmem, size = 0x6000, scoped, tag = 'scratch operand']
  #allocation3 [shape = 'f32[2,8,32]{2,1,0:T(8,128)}', space=vmem, size = 0x2000, scoped, tag = 'scratch operand']
  %s0 = inlined_call_operand.hbm [shape: f32[2,8,16], index: 0, kind: input, shape index: {}]
  %s1 = inlined_call_operand.hbm [shape: f32[16,192], index: 1, kind: input, shape index: {}]
  %s2 = inlined_call_operand.hbm [shape: f32[2,2,8,8], index: 2, kind: output, shape index: {0}]
  %s3 = inlined_call_operand.hbm [shape: f32[2,8,64], index: 3, kind: output, shape index: {1}]
  %4 = xla_tuple %s2, %s3
  %s5 = sld [smem:[#allocation0]]
  $region65: #{tpu_custom_call.1} parent=0
    _
  %s7 = ssub.s32 1, %s5
  %s8 = scalar_select 0, %s7, %s5
  $region1: #{tpu_custom_call.1} parent=0
    #allocation4 [shape = 'u8[8192]{0}', space=vmem, size = 0x2000, scoped, tag = 'input window, operand 0']
    #allocation5 [shape = 's32[2]{0}', space=sflag, size = 0x8, scoped, tag = 'scoped memory for tpu_custom_call.1']
    #allocation6 [shape = 's32[2]{0}', space=sflag, size = 0x8, scoped, tag = 'scoped memory for tpu_custom_call.1']
    #allocation7 [shape = 'u8[16384]{0}', space=vmem, size = 0x4000, scoped, tag = 'input window, operand 1, single buffered']
    #allocation8 [shape = 's32[1]{0}', space=sflag, size = 0x4, scoped, tag = 'scoped memory for tpu_custom_call.1']
    #allocation9 [shape = 'u8[8192]{0}', space=vmem, size = 0x2000, scoped, tag = 'output window, operand 0']
    #allocation10 [shape = 'u8[8192]{0}', space=vmem, size = 0x2000, scoped, tag = 'output window, operand 1']
    #allocation11 [shape = 's32[2]{0}', space=sflag, size = 0x8, scoped, tag = 'scoped memory for tpu_custom_call.1']
    %9 = vsyncpa [#allocation5], 0
    %s10 = scalar_lea.sflag [#allocation5], 1
    %11 = vsyncpa %s10, 0
    %12 = vsyncpa [#allocation8], 0
    %13 = vsyncpa [#allocation6], 0
    %s14 = scalar_lea.sflag [#allocation6], 1
    %15 = vsyncpa %s14, 0
    %16 = vsyncpa [#allocation11], 0
    %s17 = scalar_lea.sflag [#allocation11], 1
    %18 = vsyncpa %s17, 0
    loop: start=0, step=1, limit=6
    $region2: #{tpu_custom_call.1} parent=1 // loop_pre_header
      _
    $region3: #{tpu_custom_call.1} parent=1 // loop_header
      %s20 = sphi 0, %s24
      %p21 = scmp.ge.s32.totalorder %s20, 6
      %s27 = sphi 0, %s39
      %s28 = sphi 0, %s35
      %s29 = sphi 0, %s27
      %s30 = sphi 0, %s28
      %s31 = sphi 0, %s29
      %s32 = sphi 0, %s30
      %s42 = sphi 0, %s44
      %s45 = sphi 0, %s42
      %s46 = sphi 0, %s45
      %s62 = sphi 0, %s46
      %s66 = sphi 0, %s66
      %s68 = sphi 0, %s66
      %s69 = sphi 0, %s68
      %s83 = sphi 0, %s69
      %s91 = sphi 0, %s93
      %s94 = sphi 0, %s91
      %s95 = sphi 0, %s94
      %s111 = sphi 0, %s95
      %s117 = sphi 0, %s119
      %s120 = sphi 0, %s117
      %s121 = sphi 0, %s120
      %s137 = sphi 0, %s121
    $region4: #{tpu_custom_call.1} parent=1 // loop_header_branch
      %23 = sbr.rel (%p21) target = $region8
    $region5: #{tpu_custom_call.1} parent=1 // loop_body
      %s25 = ssub.s32 %s20, 1
      %s26 = ssub.s32 %s20, 2
      %s33 = sadd.s32 1, %s28
      %p34 = scmp.ge.s32.totalorder %s33, 2
      %s35 = scalar_select %p34, 0, %s33
      %s36 = sadd.s32 1, %s27
      %s37 = scalar_select %p34, %s36, %s27
      %p38 = scmp.ge.s32.totalorder %s37, 2
      %s39 = scalar_select %p38, 0, %s37
      %s40 = ssub.s32 %s27, %s39
      %p41 = scmp.eq.s32.totalorder %s40, 0
      %s43 = sadd.s32 %s42, 1
      %s44 = scalar_select %p41, %s42, %s43
      %p47 = pneg %p41
      %p48 = scmp.eq.s32.totalorder %s20, 3
      %p49 = por %p47, %p48
      %p50 = scmp.ne.s32.totalorder %s42, %s45
      %p51 = scmp.eq.s32.totalorder %s20, 0
      %p52 = por %p50, %p51
      %p53 = scmp.ne.s32.totalorder %s42, %s45
      %p54 = scmp.eq.s32.totalorder %s25, 3
      %p55 = por %p53, %p54
      %p56 = scmp.ne.s32.totalorder %s45, %s46
      %p57 = scmp.eq.s32.totalorder %s25, 0
      %p58 = por %p56, %p57
      %p59 = scmp.ne.s32.totalorder %s45, %s46
      %p60 = scmp.eq.s32.totalorder %s26, 3
      %p61 = por %p59, %p60
      %p63 = scmp.ne.s32.totalorder %s46, %s62
      %p64 = scmp.eq.s32.totalorder %s26, 0
      %p65 = por %p63, %p64
      %s67 = sadd.s32 %s66, 1
      %p70 = scmp.eq.s32.totalorder %s20, 3
      %p71 = scmp.ne.s32.totalorder %s66, %s68
      %p72 = scmp.eq.s32.totalorder %s20, 0
      %p73 = por %p71, %p72
      %p74 = scmp.ne.s32.totalorder %s66, %s68
      %p75 = scmp.eq.s32.totalorder %s25, 3
      %p76 = por %p74, %p75
      %p77 = scmp.ne.s32.totalorder %s68, %s69
      %p78 = scmp.eq.s32.totalorder %s25, 0
      %p79 = por %p77, %p78
      %p80 = scmp.ne.s32.totalorder %s68, %s69
      %p81 = scmp.eq.s32.totalorder %s26, 3
      %p82 = por %p80, %p81
      %p84 = scmp.ne.s32.totalorder %s69, %s83
      %p85 = scmp.eq.s32.totalorder %s26, 0
      %p86 = por %p84, %p85
      %s87 = ssub.s32 %s27, %s39
      %s88 = ssub.s32 %s28, %s35
      %s89 = sor.u32 %s87, %s88
      %p90 = scmp.eq.s32.totalorder %s89, 0
      %s92 = sadd.s32 %s91, 1
      %s93 = scalar_select %p90, %s91, %s92
      %p96 = pneg %p90
      %p97 = scmp.eq.s32.totalorder %s20, 3
      %p98 = por %p96, %p97
      %p99 = scmp.ne.s32.totalorder %s91, %s94
      %p100 = scmp.eq.s32.totalorder %s20, 0
      %p101 = por %p99, %p100
      %p102 = scmp.ne.s32.totalorder %s91, %s94
      %p103 = scmp.eq.s32.totalorder %s25, 3
      %p104 = por %p102, %p103
      %p105 = scmp.ne.s32.totalorder %s94, %s95
      %p106 = scmp.eq.s32.totalorder %s25, 0
      %p107 = por %p105, %p106
      %p108 = scmp.ne.s32.totalorder %s94, %s95
      %p109 = scmp.eq.s32.totalorder %s26, 3
      %p110 = por %p108, %p109
      %p112 = scmp.ne.s32.totalorder %s95, %s111
      %p113 = scmp.eq.s32.totalorder %s26, 0
      %p114 = por %p112, %p113
      %s115 = ssub.s32 %s27, %s39
      %p116 = scmp.eq.s32.totalorder %s115, 0
      %s118 = sadd.s32 %s117, 1
      %s119 = scalar_select %p116, %s117, %s118
      %p122 = pneg %p116
      %p123 = scmp.eq.s32.totalorder %s20, 3
      %p124 = por %p122, %p123
      %p125 = scmp.ne.s32.totalorder %s117, %s120
      %p126 = scmp.eq.s32.totalorder %s20, 0
      %p127 = por %p125, %p126
      %p128 = scmp.ne.s32.totalorder %s117, %s120
      %p129 = scmp.eq.s32.totalorder %s25, 3
      %p130 = por %p128, %p129
      %p131 = scmp.ne.s32.totalorder %s120, %s121
      %p132 = scmp.eq.s32.totalorder %s25, 0
      %p133 = por %p131, %p132
      %p134 = scmp.ne.s32.totalorder %s120, %s121
      %p135 = scmp.eq.s32.totalorder %s26, 3
      %p136 = por %p134, %p135
      %p138 = scmp.ne.s32.totalorder %s121, %s137
      %p139 = scmp.eq.s32.totalorder %s26, 0
      %p140 = por %p138, %p139
      %p141 = scmp.le.s32.totalorder 1, %s20
      %p142 = scmp.lt.s32.totalorder %s20, 5
      %p143 = pnand %p141, %p142
      %p144 = pneg %p143
      // Predicated region
      $region9: #{tpu_custom_call.1} parent=5 // pred_check
        _
      $region10: #{tpu_custom_call.1} parent=5 // pred_check_branch
        %146 = sbr.rel (%p143) target = $region12
      $region11: #{tpu_custom_call.1} parent=5 // pred_region
        %s147 = ssub.s32 %s20, 1
        // Predicated region
        $region13: #{tpu_custom_call.1} parent=11 // pred_check
          %p148 = pneg %p79
        $region14: #{tpu_custom_call.1} parent=11 // pred_check_branch
          %150 = sbr.rel (%p148) target = $region16
        $region15: #{tpu_custom_call.1} parent=11 // pred_region
          %s152 = ssub.s32 512, 512
          %153 = vsyncadd [#allocation8], %s152
          %s154 = sshll.u32 [#allocation7], 4
          %s155 = int_to_ptr.vmem [resolvable:$true] %s154
          %160 = dma.hbm_to_vmem [thread:$0]  %s1, 512, %s155, [#allocation8], 256, 256, 16
        $region16: #{tpu_custom_call.1} parent=11 // pred_fallthru
          _
      $region12: #{tpu_custom_call.1} parent=5 // pred_fallthru
        _
      %p161 = scmp.lt.s32.totalorder %s20, 4
      // Predicated region
      $region17: #{tpu_custom_call.1} parent=5 // pred_check
        %p162 = pneg %p161
      $region18: #{tpu_custom_call.1} parent=5 // pred_check_branch
        %164 = sbr.rel (%p162) target = $region20
      $region19: #{tpu_custom_call.1} parent=5 // pred_region
        // Predicated region
        $region21: #{tpu_custom_call.1} parent=19 // pred_check
          %p165 = pneg %p52
        $region22: #{tpu_custom_call.1} parent=19 // pred_check_branch
          %167 = sbr.rel (%p165) target = $region24
        $region23: #{tpu_custom_call.1} parent=19 // pred_region
          %s168 = sand.u32 %s42, 1
          %s169 = scalar_lea.sflag [#allocation5], %s168
          %s170 = sand.u32 %s42, 1
          %s171 = smul.addr %s170, 8
          %s172 = scalar_lea.vmem [#allocation4], %s171
          %s174 = ssub.s32 128, 128
          %175 = vsyncadd %s169, %s174
          %s176 = smul.addr %s27, 128
          %s177 = scalar_lea.hbm %s0, %s176
          %s179 = sshll.u32 %s172, 4
          %s180 = int_to_ptr.vmem [resolvable:$true] %s179
          %182 = dma.hbm_to_vmem [thread:$0]  %s177, 128, %s180, %s169
        $region24: #{tpu_custom_call.1} parent=19 // pred_fallthru
          _
      $region20: #{tpu_custom_call.1} parent=5 // pred_fallthru
        _
      %p183 = scmp.le.s32.totalorder 1, %s20
      %p184 = scmp.lt.s32.totalorder %s20, 5
      %p185 = pnand %p183, %p184
      %p186 = pneg %p185
      // Predicated region
      $region25: #{tpu_custom_call.1} parent=5 // pred_check
        _
      $region26: #{tpu_custom_call.1} parent=5 // pred_check_branch
        %188 = sbr.rel (%p185) target = $region28
      $region27: #{tpu_custom_call.1} parent=5 // pred_region
        %s189 = ssub.s32 %s20, 1
        %s190 = sand.u32 %s45, 1
        %s191 = scalar_lea.sflag [#allocation5], %s190
        %s192 = sand.u32 %s45, 1
        %s193 = smul.addr %s192, 8
        %s194 = scalar_lea.vmem [#allocation4], %s193
        // Predicated region
        $region29: #{tpu_custom_call.1} parent=27 // pred_check
          %p195 = pneg %p58
        $region30: #{tpu_custom_call.1} parent=27 // pred_check_branch
          %197 = sbr.rel (%p195) target = $region32
        $region31: #{tpu_custom_call.1} parent=27 // pred_region
          %198 = dma.done %s191, 128
        $region32: #{tpu_custom_call.1} parent=27 // pred_fallthru
          _
        // Predicated region
        $region33: #{tpu_custom_call.1} parent=27 // pred_check
          %p199 = pneg %p79
        $region34: #{tpu_custom_call.1} parent=27 // pred_check_branch
          %201 = sbr.rel (%p199) target = $region36
        $region35: #{tpu_custom_call.1} parent=27 // pred_region
          %202 = dma.done [#allocation8], 512
        $region36: #{tpu_custom_call.1} parent=27 // pred_fallthru
          _
        %s203 = sand.u32 %s45, 1
        %s204 = scalar_lea.sflag [#allocation5], %s203
        %s205 = sand.u32 %s45, 1
        %s206 = smul.addr %s205, 8
        %s207 = scalar_lea.vmem [#allocation4], %s206
        %p208 = pneg %p58
        %p209 = pneg %p55
        %p210 = pneg %p79
        %p211 = pneg %p76
        %p212 = pneg %p107
        %p213 = pneg %p104
        %s214 = sand.u32 %s94, 1
        %s215 = scalar_lea.sflag [#allocation6], %s214
        %s216 = sand.u32 %s94, 1
        %s217 = smul.addr %s216, 8
        %s218 = scalar_lea.vmem [#allocation9], %s217
        %p219 = pneg %p133
        %p220 = pneg %p130
        %s221 = sand.u32 %s120, 1
        %s222 = scalar_lea.sflag [#allocation11], %s221
        %s223 = sand.u32 %s120, 1
        %s224 = smul.addr %s223, 8
        %s225 = scalar_lea.vmem [#allocation10], %s224
        %p226 = scmp.eq.s32.totalorder %s30, 0
        // Predicated region
        $region37: #{tpu_custom_call.1} parent=27 // pred_check
          %p227 = pneg %p226
        $region38: #{tpu_custom_call.1} parent=27 // pred_check_branch
          %229 = sbr.rel (%p227) target = $region40
        $region39: #{tpu_custom_call.1} parent=27 // pred_region
          %v230 = vld [vmem:[%s194] sm:$0xff]
          %v231 = vld [vmem:[#allocation7] sm:$0xff]
          %v232 = vld [vmem:[#allocation7 + $0x8] sm:$0xff]
          %v233 = vld [vmem:[#allocation7 + $0x10] sm:$0xff]
          %v234 = vld [vmem:[#allocation7 + $0x18] sm:$0xff]
          %vm235 = vcmask 130048
          %v237 = vsel %vm235, %v230, 0
          %239 = vmatprep.subr.mxu0 %v232
          %240 = vmatpush1.msra.mxu0 %v231
          %241 = vmatprep.subr.mxu0 %v234
          %242 = vmatpush1.msra.mxu0 %v233
          %243 = vmatprep.subr.mxu0 0.0
          %244 = vmatpush1.msra.mxu0 0.0
          %245 = vmatprep.subr.mxu0 0.0
          %246 = vmatpush1.msra.mxu0 0.0
          %247 = vmatprep.subr.mxu0 0.0
          %248 = vmatpush1.msra.mxu0 0.0
          %249 = vmatprep.subr.mxu0 0.0
          %250 = vmatpush1.msra.mxu0 0.0
          %251 = vmatprep.subr.mxu0 0.0
          %252 = vmatpush1.msra.mxu0 0.0
          %253 = vmatprep.subr.mxu0 0.0
          %254 = vmatpush1.msra.mxu0 0.0
          %255 = vmatprep.subr.mxu0 0.0
          %256 = vmatpush1.msra.mxu0 0.0
          %257 = vmatprep.subr.mxu0 0.0
          %258 = vmatpush1.msra.mxu0 0.0
          %259 = vmatprep.subr.mxu0 0.0
          %260 = vmatpush1.msra.mxu0 0.0
          %261 = vmatprep.subr.mxu0 0.0
          %262 = vmatpush1.msra.mxu0 0.0
          %263 = vmatprep.subr.mxu0 0.0
          %264 = vmatpush1.msra.mxu0 0.0
          %265 = vmatprep.subr.mxu0 0.0
          %266 = vmatpush1.msra.mxu0 0.0
          %267 = vmatprep.subr.mxu0 0.0
          %268 = vmatpush1.msra.mxu0 0.0
          %269 = vmatprep.subr.mxu0 0.0
          %270 = vmatpush1.msra.mxu0 0.0
          %271 = vmatprep.subr.mxu0 0.0
          %272 = vmatpush1.msra.mxu0 0.0
          %273 = vmatprep.subr.mxu0 0.0
          %274 = vmatpush1.msra.mxu0 0.0
          %275 = vmatprep.subr.mxu0 0.0
          %276 = vmatpush1.msra.mxu0 0.0
          %277 = vmatprep.subr.mxu0 0.0
          %278 = vmatpush1.msra.mxu0 0.0
          %279 = vmatprep.subr.mxu0 0.0
          %280 = vmatpush1.msra.mxu0 0.0
          %281 = vmatprep.subr.mxu0 0.0
          %282 = vmatpush1.msra.mxu0 0.0
          %283 = vmatprep.subr.mxu0 0.0
          %284 = vmatpush1.msra.mxu0 0.0
          %285 = vmatprep.subr.mxu0 0.0
          %286 = vmatpush1.msra.mxu0 0.0
          %287 = vmatprep.subr.mxu0 0.0
          %288 = vmatpush1.msra.mxu0 0.0
          %289 = vmatprep.subr.mxu0 0.0
          %290 = vmatpush1.msra.mxu0 0.0
          %291 = vmatprep.subr.mxu0 0.0
          %292 = vmatpush1.msra.mxu0 0.0
          %293 = vmatprep.subr.mxu0 0.0
          %294 = vmatpush1.msra.mxu0 0.0
          %295 = vmatprep.subr.mxu0 0.0
          %296 = vmatpush1.msra.mxu0 0.0
          %297 = vmatprep.subr.mxu0 0.0
          %298 = vmatpush1.msra.mxu0 0.0
          %299 = vmatprep.subr.mxu0 0.0
          %300 = vmatpush1.msra.mxu0 0.0
          %301 = vmatprep.subr.mxu0 0.0
          %302 = vmatpush1.msra.mxu0 0.0
          %303 = vmatprep.mubr.f32.mxu0 0.0
          %304 = vmatmul.mubr.f32.gmra.mrb[0].mxu0 %v237
          %v305 = vpop.f32.mrb[0].mxu0
          %v306 = vadd.f32 0.0, %v305
          %v307 = vpop.f32.mrb[0].mxu0
          %v308 = vadd.f32 0.0, %v307
          %309 = vdwg.mxu0
          %vm310 = vcmask 261120
          %311 = vst.msk [vmem:[#allocation2] sm:$0xff] %vm310, %v306
          %313 = vrot.lane.b32.xlu0 %v306, 96
          %v314 = vpop.permute.xlu0 %313
          %s316 = scalar_lea.vmem [#allocation2], 8
          %317 = vst.msk [vmem:[%s316] sm:$0xff] %vm310, %v314
          %318 = vrot.lane.b32.xlu0 %v306, 64
          %v319 = vpop.permute.xlu0 %318
          %s321 = scalar_lea.vmem [#allocation2], 16
          %322 = vst.msk [vmem:[%s321] sm:$0xff] %vm310, %v319
          %323 = vrot.lane.b32.xlu0 %v306, 32
          %v324 = vpop.permute.xlu0 %323
          %s326 = scalar_lea.vmem [#allocation2], 24
          %327 = vst.msk [vmem:[%s326] sm:$0xff] %vm310, %v324
          %s328 = scalar_lea.vmem [#allocation2], 32
          %329 = vst.msk [vmem:[%s328] sm:$0xff] %vm310, %v308
          %331 = vrot.lane.b32.xlu0 %v308, 96
          %v332 = vpop.permute.xlu0 %331
          %s334 = scalar_lea.vmem [#allocation2], 40
          %335 = vst.msk [vmem:[%s334] sm:$0xff] %vm310, %v332
        $region40: #{tpu_custom_call.1} parent=27 // pred_fallthru
          _
        %s336 = smul.u32 %s30, 8
        %s337 = scalar_lea.vmem [#allocation2], %s336
        %v338 = vld [vmem:[%s337] sm:$0xff]
        %s339 = sadd.s32 %s30, 2
        %s340 = smul.u32 %s339, 8
        %s341 = scalar_lea.vmem [#allocation2], %s340
        %v342 = vld [vmem:[%s341] sm:$0xff]
        %s343 = sadd.s32 %s30, 4
        %s344 = smul.u32 %s343, 8
        %s345 = scalar_lea.vmem [#allocation2], %s344
        %v346 = vld [vmem:[%s345] sm:$0xff]
        %vm347 = vcmask 261120
        %v349 = vsel %vm347, %v338, 0
        %v352 = vsel %vm347, %v342, 0
        %354 = vmatprep.subr.mxu0 0.0
        %355 = vmatpush1.xpose.msra.mxu0 %v352
        %356 = vmatprep.subr.mxu0 0.0
        %357 = vmatpush1.xpose.msra.mxu0 0.0
        %358 = vmatprep.subr.mxu0 0.0
        %359 = vmatpush1.xpose.msra.mxu0 0.0
        %360 = vmatprep.subr.mxu0 0.0
        %361 = vmatpush1.xpose.msra.mxu0 0.0
        %362 = vmatprep.subr.mxu0 0.0
        %363 = vmatpush1.xpose.msra.mxu0 0.0
        %364 = vmatprep.subr.mxu0 0.0
        %365 = vmatpush1.xpose.msra.mxu0 0.0
        %366 = vmatprep.subr.mxu0 0.0
        %367 = vmatpush1.xpose.msra.mxu0 0.0
        %368 = vmatprep.subr.mxu0 0.0
        %369 = vmatpush1.xpose.msra.mxu0 0.0
        %370 = vmatprep.subr.mxu0 0.0
        %371 = vmatpush1.xpose.msra.mxu0 0.0
        %372 = vmatprep.subr.mxu0 0.0
        %373 = vmatpush1.xpose.msra.mxu0 0.0
        %374 = vmatprep.subr.mxu0 0.0
        %375 = vmatpush1.xpose.msra.mxu0 0.0
        %376 = vmatprep.subr.mxu0 0.0
        %377 = vmatpush1.xpose.msra.mxu0 0.0
        %378 = vmatprep.subr.mxu0 0.0
        %379 = vmatpush1.xpose.msra.mxu0 0.0
        %380 = vmatprep.subr.mxu0 0.0
        %381 = vmatpush1.xpose.msra.mxu0 0.0
        %382 = vmatprep.subr.mxu0 0.0
        %383 = vmatpush1.xpose.msra.mxu0 0.0
        %384 = vmatprep.subr.mxu0 0.0
        %385 = vmatpush1.xpose.msra.mxu0 0.0
        %386 = vmatprep.subr.mxu0 0.0
        %387 = vmatpush1.xpose.msra.mxu0 0.0
        %388 = vmatprep.subr.mxu0 0.0
        %389 = vmatpush1.xpose.msra.mxu0 0.0
        %390 = vmatprep.subr.mxu0 0.0
        %391 = vmatpush1.xpose.msra.mxu0 0.0
        %392 = vmatprep.subr.mxu0 0.0
        %393 = vmatpush1.xpose.msra.mxu0 0.0
        %394 = vmatprep.subr.mxu0 0.0
        %395 = vmatpush1.xpose.msra.mxu0 0.0
        %396 = vmatprep.subr.mxu0 0.0
        %397 = vmatpush1.xpose.msra.mxu0 0.0
        %398 = vmatprep.subr.mxu0 0.0
        %399 = vmatpush1.xpose.msra.mxu0 0.0
        %400 = vmatprep.subr.mxu0 0.0
        %401 = vmatpush1.xpose.msra.mxu0 0.0
        %402 = vmatprep.subr.mxu0 0.0
        %403 = vmatpush1.xpose.msra.mxu0 0.0
        %404 = vmatprep.subr.mxu0 0.0
        %405 = vmatpush1.xpose.msra.mxu0 0.0
        %406 = vmatprep.subr.mxu0 0.0
        %407 = vmatpush1.xpose.msra.mxu0 0.0
        %408 = vmatprep.subr.mxu0 0.0
        %409 = vmatpush1.xpose.msra.mxu0 0.0
        %410 = vmatprep.subr.mxu0 0.0
        %411 = vmatpush1.xpose.msra.mxu0 0.0
        %412 = vmatprep.subr.mxu0 0.0
        %413 = vmatpush1.xpose.msra.mxu0 0.0
        %414 = vmatprep.subr.mxu0 0.0
        %415 = vmatpush1.xpose.msra.mxu0 0.0
        %416 = vmatprep.subr.mxu0 0.0
        %417 = vmatpush1.xpose.msra.mxu0 0.0
        %418 = vmatprep.mubr.f32.mxu0 0.0
        %419 = vmatmul.mubr.f32.gmra.mrb[0].mxu0 %v349
        %v420 = vpop.f32.mrb[0].mxu0
        %v421 = vadd.f32 0.0, %v420
        %v422 = vpop.f32.mrb[0].mxu0
        %423 = vdwg.mxu0
        %vm424 = vcmask 64512
        %v425 = vsel %vm424, %v421, -inf
        %426 = vmax.xlane.f32.xlu0 %v425
        %v427 = vpop.xlane.xlu0 %426
        %v428 = vsub.f32 %v421, %v427
        %v429 = vmul.f32 %v428, 1.442695
        %v430 = vpow.pop %v429
        %v431 = vsel %vm424, %v430, 0.0
        %432 = vadd.xlane.f32.xlu0 %v431
        %v433 = vpop.xlane.xlu0 %432
        %v434 = vrcp.pop %v433
        %v435 = vmul.f32 %v430, %v434
        %436 = vst.msk [vmem:[%s218] sm:$0xff] %vm424, %v435
        %v438 = vsel %vm424, %v435, 0
        %440 = vmatprep.subr.mxu0 0.0
        %441 = vmatpush1.msra.mxu0 %v346
        %442 = vmatprep.subr.mxu0 0.0
        %443 = vmatpush1.msra.mxu0 0.0
        %444 = vmatprep.subr.mxu0 0.0
        %445 = vmatpush1.msra.mxu0 0.0
        %446 = vmatprep.subr.mxu0 0.0
        %447 = vmatpush1.msra.mxu0 0.0
        %448 = vmatprep.subr.mxu0 0.0
        %449 = vmatpush1.msra.mxu0 0.0
        %450 = vmatprep.subr.mxu0 0.0
        %451 = vmatpush1.msra.mxu0 0.0
        %452 = vmatprep.subr.mxu0 0.0
        %453 = vmatpush1.msra.mxu0 0.0
        %454 = vmatprep.subr.mxu0 0.0
        %455 = vmatpush1.msra.mxu0 0.0
        %456 = vmatprep.subr.mxu0 0.0
        %457 = vmatpush1.msra.mxu0 0.0
        %458 = vmatprep.subr.mxu0 0.0
        %459 = vmatpush1.msra.mxu0 0.0
        %460 = vmatprep.subr.mxu0 0.0
        %461 = vmatpush1.msra.mxu0 0.0
        %462 = vmatprep.subr.mxu0 0.0
        %463 = vmatpush1.msra.mxu0 0.0
        %464 = vmatprep.subr.mxu0 0.0
        %465 = vmatpush1.msra.mxu0 0.0
        %466 = vmatprep.subr.mxu0 0.0
        %467 = vmatpush1.msra.mxu0 0.0
        %468 = vmatprep.subr.mxu0 0.0
        %469 = vmatpush1.msra.mxu0 0.0
        %470 = vmatprep.subr.mxu0 0.0
        %471 = vmatpush1.msra.mxu0 0.0
        %472 = vmatprep.subr.mxu0 0.0
        %473 = vmatpush1.msra.mxu0 0.0
        %474 = vmatprep.subr.mxu0 0.0
        %475 = vmatpush1.msra.mxu0 0.0
        %476 = vmatprep.subr.mxu0 0.0
        %477 = vmatpush1.msra.mxu0 0.0
        %478 = vmatprep.subr.mxu0 0.0
        %479 = vmatpush1.msra.mxu0 0.0
        %480 = vmatprep.subr.mxu0 0.0
        %481 = vmatpush1.msra.mxu0 0.0
        %482 = vmatprep.subr.mxu0 0.0
        %483 = vmatpush1.msra.mxu0 0.0
        %484 = vmatprep.subr.mxu0 0.0
        %485 = vmatpush1.msra.mxu0 0.0
        %486 = vmatprep.subr.mxu0 0.0
        %487 = vmatpush1.msra.mxu0 0.0
        %488 = vmatprep.subr.mxu0 0.0
        %489 = vmatpush1.msra.mxu0 0.0
        %490 = vmatprep.subr.mxu0 0.0
        %491 = vmatpush1.msra.mxu0 0.0
        %492 = vmatprep.subr.mxu0 0.0
        %493 = vmatpush1.msra.mxu0 0.0
        %494 = vmatprep.subr.mxu0 0.0
        %495 = vmatpush1.msra.mxu0 0.0
        %496 = vmatprep.subr.mxu0 0.0
        %497 = vmatpush1.msra.mxu0 0.0
        %498 = vmatprep.subr.mxu0 0.0
        %499 = vmatpush1.msra.mxu0 0.0
        %500 = vmatprep.subr.mxu0 0.0
        %501 = vmatpush1.msra.mxu0 0.0
        %502 = vmatprep.subr.mxu0 0.0
        %503 = vmatpush1.msra.mxu0 0.0
        %504 = vmatprep.mubr.f32.mxu0 0.0
        %505 = vmatmul.mubr.f32.gmra.mrb[0].mxu0 %v438
        %v506 = vpop.f32.mrb[0].mxu0
        %v507 = vadd.f32 0.0, %v506
        %v508 = vpop.f32.mrb[0].mxu0
        %509 = vdwg.mxu0
        %s510 = scalar_lea.vmem [#allocation3], %s336
        %511 = vst.msk [vmem:[%s510] sm:$0xff] %vm347, %v507
        %p512 = scmp.eq.s32.totalorder %s30, 1
        // Predicated region
        $region41: #{tpu_custom_call.1} parent=27 // pred_check
          %p513 = pneg %p512
        $region42: #{tpu_custom_call.1} parent=27 // pred_check_branch
          %515 = sbr.rel (%p513) target = $region44
        $region43: #{tpu_custom_call.1} parent=27 // pred_region
          %v516 = vld [vmem:[#allocation3] sm:$0xff]
          %s517 = scalar_lea.vmem [#allocation3], 8
          %v518 = vld [vmem:[%s517] sm:$0xff]
          %520 = vrot.lane.b32.xlu0 %v518, 32
          %v521 = vpop.permute.xlu0 %520
          %v523 = vsel %vm347, %v516, %v521
          %vm524 = vcmask 523264
          %525 = vst.msk [vmem:[%s225] sm:$0xff] %vm524, %v523
        $region44: #{tpu_custom_call.1} parent=27 // pred_fallthru
          _
        %s526 = sand.u32 %s94, 1
        %s527 = scalar_lea.sflag [#allocation6], %s526
        %s528 = sand.u32 %s94, 1
        %s529 = smul.addr %s528, 8
        %s530 = scalar_lea.vmem [#allocation9], %s529
        %s531 = sand.u32 %s120, 1
        %s532 = scalar_lea.sflag [#allocation11], %s531
        %s533 = sand.u32 %s120, 1
        %s534 = smul.addr %s533, 8
        %s535 = scalar_lea.vmem [#allocation10], %s534
        // Predicated region
        $region45: #{tpu_custom_call.1} parent=27 // pred_check
          %p536 = pneg %p104
        $region46: #{tpu_custom_call.1} parent=27 // pred_check_branch
          %538 = sbr.rel (%p536) target = $region48
        $region47: #{tpu_custom_call.1} parent=27 // pred_region
          %s540 = ssub.s32 128, 128
          %541 = vsyncadd %s527, %s540
          %s542 = smul.addr %s29, 2
          %s543 = sadd.s32 %s30, %s542
          %s544 = smul.addr %s543, 128
          %s545 = scalar_lea.hbm %s2, %s544
          %s547 = sshll.u32 %s530, 4
          %s548 = int_to_ptr.vmem [resolvable:$true] %s547
          %550 = dma.vmem_to_hbm [thread:$0]  %s548, 128, %s545, %s527
        $region48: #{tpu_custom_call.1} parent=27 // pred_fallthru
          _
        // Predicated region
        $region49: #{tpu_custom_call.1} parent=27 // pred_check
          %p551 = pneg %p130
        $region50: #{tpu_custom_call.1} parent=27 // pred_check_branch
          %553 = sbr.rel (%p551) target = $region52
        $region51: #{tpu_custom_call.1} parent=27 // pred_region
          %s555 = ssub.s32 128, 128
          %556 = vsyncadd %s532, %s555
          %s557 = smul.addr %s29, 128
          %s558 = scalar_lea.hbm %s3, %s557
          %s560 = sshll.u32 %s535, 4
          %s561 = int_to_ptr.vmem [resolvable:$true] %s560
          %563 = dma.vmem_to_hbm [thread:$0]  %s561, 128, %s558, %s532
        $region52: #{tpu_custom_call.1} parent=27 // pred_fallthru
          _
      $region28: #{tpu_custom_call.1} parent=5 // pred_fallthru
        _
      %p564 = scmp.le.s32.totalorder 2, %s20
      // Predicated region
      $region53: #{tpu_custom_call.1} parent=5 // pred_check
        %p565 = pneg %p564
      $region54: #{tpu_custom_call.1} parent=5 // pred_check_branch
        %567 = sbr.rel (%p565) target = $region56
      $region55: #{tpu_custom_call.1} parent=5 // pred_region
        %s568 = ssub.s32 %s20, 2
        // Predicated region
        $region57: #{tpu_custom_call.1} parent=55 // pred_check
          %p569 = pneg %p110
        $region58: #{tpu_custom_call.1} parent=55 // pred_check_branch
          %571 = sbr.rel (%p569) target = $region60
        $region59: #{tpu_custom_call.1} parent=55 // pred_region
          %s572 = sand.u32 %s95, 1
          %s573 = scalar_lea.sflag [#allocation6], %s572
          %s574 = sand.u32 %s95, 1
          %s575 = smul.addr %s574, 8
          %s576 = scalar_lea.vmem [#allocation9], %s575
          %577 = dma.done %s573, 128
        $region60: #{tpu_custom_call.1} parent=55 // pred_fallthru
          _
        // Predicated region
        $region61: #{tpu_custom_call.1} parent=55 // pred_check
          %p578 = pneg %p136
        $region62: #{tpu_custom_call.1} parent=55 // pred_check_branch
          %580 = sbr.rel (%p578) target = $region64
        $region63: #{tpu_custom_call.1} parent=55 // pred_region
          %s581 = sand.u32 %s121, 1
          %s582 = scalar_lea.sflag [#allocation11], %s581
          %s583 = sand.u32 %s121, 1
          %s584 = smul.addr %s583, 8
          %s585 = scalar_lea.vmem [#allocation10], %s584
          %586 = dma.done %s582, 128
        $region64: #{tpu_custom_call.1} parent=55 // pred_fallthru
          _
      $region56: #{tpu_custom_call.1} parent=5 // pred_fallthru
        _
    $region6: #{tpu_custom_call.1} parent=1 // loop_footer
      %s24 = sadd.s32 1, %s20
    $region7: #{tpu_custom_call.1} parent=1 // loop_footer_branch
      %19 = sbr.rel target = $region3
    $region8: #{tpu_custom_call.1} parent=1 // loop_exit
      _
    %587 = vsyncpa [#allocation5], 1
    %s588 = scalar_lea.sflag [#allocation5], 1
    %589 = vsyncpa %s588, 1
    %590 = vsyncpa [#allocation8], 1
    %591 = vsyncpa [#allocation6], 1
    %s592 = scalar_lea.sflag [#allocation6], 1
    %593 = vsyncpa %s592, 1
    %594 = vsyncpa [#allocation11], 1
    %s595 = scalar_lea.sflag [#allocation11], 1
    %596 = vsyncpa %s595, 1

</llo_original>
